<compile_context>
chip_gen: v5e
topology: v5e:2x2
jax: 0.10.0
libtpu: 0.0.40
codegen_flags: <defaults>
</compile_context>

<pallas_src>
import jax
import jax.numpy as jnp
from jax.experimental import pallas as pl
from jax.experimental.pallas import tpu as pltpu

F1 = 2                 # attention rows (tril is F1 x F1)
F2 = 10                # number of per-head projections
D = F1 * F2            # 20 = Linear in/out features
SEG = 128              # lane-aligned segment width inside the fused weight
W_N = 3 * SEG          # 384 fused output columns: [q-row1 | k-row0 | k-row1 + vsum]


def _head_kernel(x_ref, w_ref, o_ref):
    """One batch-tile: fused projection matmul + constant-selector reduction + softmax.

    x_ref : (TB, 20)   flattened input tile
    w_ref : (20, 384)  fused weights (segment layout documented in pack_head_weights)
    o_ref : (TB, 20)   lane-dense output slab [row0 outputs | row1 outputs]
    """
    x = x_ref[...]                                                      # (TB, 20)
    proj = jnp.dot(x, w_ref[...], preferred_element_type=jnp.float32)  # (TB, 384)

    q1 = proj[:, 0 * SEG:1 * SEG]       # q row-1, column i*10+d (pad lanes are 0)
    k0 = proj[:, 1 * SEG:2 * SEG]       # k row-0
    k1 = proj[:, 2 * SEG:3 * SEG]       # k row-1 (lanes 100-119 hold vsum; q1 is 0 there)
    vsum = proj[:, 2 * SEG + F2 * F2: 2 * SEG + F2 * F2 + 2 * F2]       # (TB, 20)
    vs0 = vsum[:, :F2]                  # sum_t v_i[:, 0, t]
    vs1 = vsum[:, F2:]                  # sum_t v_i[:, 1, t]

    # Per-projection score reductions as one (TB,256)x(256,20) matmul against a constant
    # block-diagonal 0/1 selector built from iota + compares (no DMA, no int division):
    #   scores[:, i] = s10_i = sum_d q1_i*k0_i,  scores[:, 10+i] = s11_i = sum_d q1_i*k1_i
    qk = jnp.concatenate([q1 * k0, q1 * k1], axis=-1)                   # (TB, 256)
    c = jax.lax.broadcasted_iota(jnp.int32, (2 * SEG, 2 * F2), 0)       # product lane
    o = jax.lax.broadcasted_iota(jnp.int32, (2 * SEG, 2 * F2), 1)       # score column
    seg_o = (o >= F2).astype(jnp.int32)                                 # 0 -> s10, 1 -> s11
    lo = (o - seg_o * F2) * F2 + seg_o * SEG                            # first hot lane
    sel = ((c >= lo) & (c < lo + F2)).astype(jnp.float32)               # (256, 20)
    scores = jnp.dot(qk, sel, preferred_element_type=jnp.float32)       # (TB, 20)
    s10 = scores[:, :F2]
    s11 = scores[:, F2:]

    # Causal mask with F1=2: softmax row 0 is exactly [1, 0]; row 1 is a 2-logit softmax,
    # identical to sigmoid(s11 - s10). Numerically safe for any magnitude of s10-s11.
    p11 = 1.0 / (1.0 + jnp.exp(s10 - s11))
    out0 = vs0                                       # row 0: sum_t v[:, 0, t]
    out1 = vs0 + p11 * (vs1 - vs0)                   # row 1: p10*vs0 + p11*vs1

    o_ref[...] = jnp.concatenate([out0, out1], axis=-1)                 # single store (TB, 20)


def pack_head_weights(Wq, Wk, Wv):
    """Fold all 10 projections into one (20, 384) lane-dense weight matrix.

    Call ONCE at init (weights are static across forward calls). Segment layout:
      lanes [  0,100): q row-1 outputs, col i*10+d
      lanes [128,228): k row-0 outputs
      lanes [256,356): k row-1 outputs
      lanes [356,366): sum_t v row-0  (column i)
      lanes [366,376): sum_t v row-1  (column i)
      all other lanes: zero padding
    """
    assert Wq.shape == (F2, D, D) and Wk.shape == (F2, D, D) and Wv.shape == (F2, D, D)
    # torch Linear layout: W[i] is (out_features, in_features); y = x @ W[i].T
    WqT = jnp.swapaxes(Wq, -1, -2)                 # (F2, D, D); column o = W[i][o, :]
    WkT = jnp.swapaxes(Wk, -1, -2)
    WvT = jnp.swapaxes(Wv, -1, -2)

    def flat(wt_slice):                            # (F2, D, F2) -> (D, F2*F2), col = i*F2 + d
        return jnp.transpose(wt_slice, (1, 0, 2)).reshape(D, F2 * F2)

    q1 = flat(WqT[:, :, F2:])                      # q row-1 outputs only (row 0 is dead)
    k0 = flat(WkT[:, :, :F2])                      # k row-0 outputs
    k1 = flat(WkT[:, :, F2:])                      # k row-1 outputs
    # sum_t (wei @ v) only needs v pre-summed over t within each attention row:
    vs0 = WvT[:, :, :F2].sum(-1).T                 # (D, F2), column i = sum_t v_i row 0
    vs1 = WvT[:, :, F2:].sum(-1).T                 # (D, F2), column i = sum_t v_i row 1

    seg0 = jnp.pad(q1, ((0, 0), (0, SEG - F2 * F2)))                     # (20, 128)
    seg1 = jnp.pad(k0, ((0, 0), (0, SEG - F2 * F2)))                     # (20, 128)
    seg2 = jnp.concatenate([k1, vs0, vs1], axis=1)                        # (20, 120)
    seg2 = jnp.pad(seg2, ((0, 0), (0, SEG - seg2.shape[1])))              # (20, 128)
    return jnp.concatenate([seg0, seg1, seg2], axis=1)                    # (20, 384)


def _pick_batch_tile(B):
    """Full batch when small; otherwise a VMEM-friendly multiple of 8 (per-row live
    intermediates are ~2.5 KiB, so 2048 rows stay well inside every generation's
    scoped-VMEM default, including v7x)."""
    if B <= 2048:
        return B
    for tb in (2048, 1024, 512, 256, 128, 64, 32, 16, 8):
        if B % tb == 0:
            return tb
    return B                                       # ragged batch: single full block


@jax.jit
def head_forward(x, w_packed):
    """x: (B, 2, 10) f32.  w_packed: (20, 384) from pack_head_weights (built once)."""
    B = x.shape[0]
    xf = x.reshape(B, D)
    TB = _pick_batch_tile(B)
    n_tiles = B // TB

    flops = 2 * B * D * W_N + 2 * B * (2 * SEG) * (2 * F2)
    bytes_accessed = 4 * (B * D + D * W_N + B * F1 * F2)

    out = pl.pallas_call(
        _head_kernel,
        out_shape=jax.ShapeDtypeStruct((B, F1 * F2), jnp.float32),
        grid=(n_tiles,),
        in_specs=[
            pl.BlockSpec((TB, D), lambda i: (i, 0)),
            pl.BlockSpec((D, W_N), lambda i: (0, 0)),    # constant map: stays VMEM-resident
        ],
        out_specs=pl.BlockSpec((TB, F1 * F2), lambda i: (i, 0)),
        compiler_params=pltpu.CompilerParams(
            dimension_semantics=("parallel",)),          # batch axis: megacore-splittable
        cost_estimate=pl.CostEstimate(
            flops=flops, transcendentals=B * F2, bytes_accessed=bytes_accessed),
    )(xf, w_packed)                                      # (B, 20) lane-dense slab

    # y[b, h, i]: h=0 -> columns 0..9, h=1 -> columns 10..19
    return out.reshape(B, F1, F2)


def reference(x, Wq, Wk, Wv):
    """Pure-JAX transcription of the PyTorch Head.forward."""
    B, H, T = x.shape
    xf = x.reshape(B, -1)
    tril = jnp.tril(jnp.ones((F1, F1), jnp.float32))
    mask = tril[:T, :T] == 0                       # slicing clips to (2, 2), like torch
    ys = []
    for i in range(F2):
        k = (xf @ Wk[i].T).reshape(B, H, T)
        q = (xf @ Wq[i].T).reshape(B, H, T)
        v = (xf @ Wv[i].T).reshape(B, H, T)
        s = jnp.einsum("bht,bgt->bhg", q, k)
        s = jnp.where(mask, -jnp.inf, s)
        w = jax.nn.softmax(s, axis=-1)
        ys.append(jnp.sum(jnp.einsum("bhg,bgt->bht", w, v), axis=-1, keepdims=True))
    return jnp.concatenate(ys, axis=-1)


if __name__ == "__main__":
    key = jax.random.PRNGKey(0)
    kx, kq, kk, kv = jax.random.split(key, 4)

    B = 2
    x = jax.random.normal(kx, (B, F1, F2), jnp.float32)
    bound = 1.0 / (D ** 0.5)                       # deterministic, kaiming-uniform-like init
    Wq = jax.random.uniform(kq, (F2, D, D), jnp.float32, -bound, bound)
    Wk = jax.random.uniform(kk, (F2, D, D), jnp.float32, -bound, bound)
    Wv = jax.random.uniform(kv, (F2, D, D), jnp.float32, -bound, bound)

    # Pack the static weights ONCE at init (not inside the per-call forward).
    w_packed = jax.block_until_ready(pack_head_weights(Wq, Wk, Wv))

    y = jax.block_until_ready(head_forward(x, w_packed))
    y_ref = jax.block_until_ready(reference(x, Wq, Wk, Wv))

    assert y.shape == (B, F1, F2), y.shape
    assert jnp.allclose(y, y_ref, atol=1e-4, rtol=1e-4), (y, y_ref)
    print("KERNEL_OK")
</pallas_src>

<mosaic_0001>
module attributes {stable_mosaic.version = 11 : i64} {
  func.func @_head_kernel(%arg0: i32, %arg1: memref<2x20xf32, #tpu.memory_space<vmem>>, %arg2: memref<20x384xf32, #tpu.memory_space<vmem>>, %arg3: memref<2x20xf32, #tpu.memory_space<vmem>>) attributes {dimension_semantics = [#tpu.dimension_semantics<parallel>], iteration_bounds = array<i64: 1>, scalar_prefetch = 0 : i64, scratch_operands = 0 : i64, tpu.core_type = #tpu.core_type<tc>, window_params = [{transform_indices = @transform_0, window_bounds = array<i64: 2, 20>}, {pipeline_mode = #tpu.pipeline_mode<synchronous>, transform_indices = @transform_1, window_bounds = array<i64: 20, 384>}, {transform_indices = @transform_2, window_bounds = array<i64: 2, 20>}]} {
    %c0 = arith.constant 0 : index
    %c0_0 = arith.constant 0 : index
    %0 = vector.load %arg1[%c0, %c0_0] : memref<2x20xf32, #tpu.memory_space<vmem>>, vector<2x20xf32>
    %c0_1 = arith.constant 0 : index
    %c0_2 = arith.constant 0 : index
    %1 = vector.load %arg2[%c0_1, %c0_2] : memref<20x384xf32, #tpu.memory_space<vmem>>, vector<20x384xf32>
    %cst = arith.constant dense<0.000000e+00> : vector<2x384xf32>
    %2 = tpu.matmul %0, %1, %cst {dimension_numbers = #tpu.dot_dimension_numbers<[1], [0], [0], [1], [0, 0, 1, 1], [], []>} : vector<2x20xf32>, vector<20x384xf32>, vector<2x384xf32> -> vector<2x384xf32>
    %3 = vector.extract_strided_slice %2 {offsets = [0, 0], sizes = [2, 128], strides = [1, 1]} : vector<2x384xf32> to vector<2x128xf32>
    %4 = vector.extract_strided_slice %2 {offsets = [0, 128], sizes = [2, 128], strides = [1, 1]} : vector<2x384xf32> to vector<2x128xf32>
    %5 = vector.extract_strided_slice %2 {offsets = [0, 256], sizes = [2, 128], strides = [1, 1]} : vector<2x384xf32> to vector<2x128xf32>
    %6 = vector.extract_strided_slice %2 {offsets = [0, 356], sizes = [2, 20], strides = [1, 1]} : vector<2x384xf32> to vector<2x20xf32>
    %7 = vector.extract_strided_slice %6 {offsets = [0, 0], sizes = [2, 10], strides = [1, 1]} : vector<2x20xf32> to vector<2x10xf32>
    %8 = vector.extract_strided_slice %6 {offsets = [0, 10], sizes = [2, 10], strides = [1, 1]} : vector<2x20xf32> to vector<2x10xf32>
    %9 = arith.mulf %3, %4 : vector<2x128xf32>
    %10 = arith.mulf %3, %5 : vector<2x128xf32>
    %11 = tpu.concatenate %9, %10 in 1 : vector<2x128xf32>, vector<2x128xf32> -> vector<2x256xf32>
    %12 = tpu.iota {dimensions = array<i32: 0>} : vector<256x20xi32>
    %13 = tpu.iota {dimensions = array<i32: 1>} : vector<256x20xi32>
    %c10_i32 = arith.constant 10 : i32
    %14 = vector.broadcast %c10_i32 : i32 to vector<256x20xi32>
    %15 = arith.cmpi sge, %13, %14 : vector<256x20xi32>
    %16 = arith.extui %15 : vector<256x20xi1> to vector<256x20xi32>
    %c10_i32_3 = arith.constant 10 : i32
    %17 = vector.broadcast %c10_i32_3 : i32 to vector<256x20xi32>
    %18 = arith.muli %16, %17 : vector<256x20xi32>
    %19 = arith.subi %13, %18 : vector<256x20xi32>
    %c10_i32_4 = arith.constant 10 : i32
    %20 = vector.broadcast %c10_i32_4 : i32 to vector<256x20xi32>
    %21 = arith.muli %19, %20 : vector<256x20xi32>
    %c128_i32 = arith.constant 128 : i32
    %22 = vector.broadcast %c128_i32 : i32 to vector<256x20xi32>
    %23 = arith.muli %16, %22 : vector<256x20xi32>
    %24 = arith.addi %21, %23 : vector<256x20xi32>
    %25 = arith.cmpi sge, %12, %24 : vector<256x20xi32>
    %c10_i32_5 = arith.constant 10 : i32
    %26 = vector.broadcast %c10_i32_5 : i32 to vector<256x20xi32>
    %27 = arith.addi %24, %26 : vector<256x20xi32>
    %28 = arith.cmpi slt, %12, %27 : vector<256x20xi32>
    %29 = arith.andi %25, %28 : vector<256x20xi1>
    %30 = arith.extui %29 : vector<256x20xi1> to vector<256x20xi32>
    %31 = arith.sitofp %30 : vector<256x20xi32> to vector<256x20xf32>
    %cst_6 = arith.constant dense<0.000000e+00> : vector<2x20xf32>
    %32 = tpu.matmul %11, %31, %cst_6 {dimension_numbers = #tpu.dot_dimension_numbers<[1], [0], [0], [1], [0, 0, 1, 1], [], []>} : vector<2x256xf32>, vector<256x20xf32>, vector<2x20xf32> -> vector<2x20xf32>
    %33 = vector.extract_strided_slice %32 {offsets = [0, 0], sizes = [2, 10], strides = [1, 1]} : vector<2x20xf32> to vector<2x10xf32>
    %34 = vector.extract_strided_slice %32 {offsets = [0, 10], sizes = [2, 10], strides = [1, 1]} : vector<2x20xf32> to vector<2x10xf32>
    %35 = arith.subf %33, %34 : vector<2x10xf32>
    %36 = math.exp %35 : vector<2x10xf32>
    %cst_7 = arith.constant 1.000000e+00 : f32
    %37 = vector.broadcast %cst_7 : f32 to vector<2x10xf32>
    %38 = arith.addf %37, %36 : vector<2x10xf32>
    %cst_8 = arith.constant 1.000000e+00 : f32
    %39 = vector.broadcast %cst_8 : f32 to vector<2x10xf32>
    %40 = arith.divf %39, %38 : vector<2x10xf32>
    %41 = arith.subf %8, %7 : vector<2x10xf32>
    %42 = arith.mulf %40, %41 : vector<2x10xf32>
    %43 = arith.addf %7, %42 : vector<2x10xf32>
    %44 = tpu.concatenate %7, %43 in 1 : vector<2x10xf32>, vector<2x10xf32> -> vector<2x20xf32>
    %c0_9 = arith.constant 0 : index
    %c0_10 = arith.constant 0 : index
    %45 = vector.load %arg3[%c0_9, %c0_10] : memref<2x20xf32, #tpu.memory_space<vmem>>, vector<2x20xf32>
    tpu.vector_store %arg3[%c0_9, %c0_10], %44 {strides = array<i32>} : memref<2x20xf32, #tpu.memory_space<vmem>>, vector<2x20xf32>,
    return
  }
  func.func @transform_0(%arg0: i32) -> (i32, i32) {
    %c0_i32 = arith.constant 0 : i32
    %c0_i32_0 = arith.constant 0 : i32
    return %arg0, %c0_i32 : i32, i32
  }
  func.func @transform_1(%arg0: i32) -> (i32, i32) {
    %c0_i32 = arith.constant 0 : i32
    %c0_i32_0 = arith.constant 0 : i32
    %c0_i32_1 = arith.constant 0 : i32
    return %c0_i32, %c0_i32_0 : i32, i32
  }
  func.func @transform_2(%arg0: i32) -> (i32, i32) {
    %c0_i32 = arith.constant 0 : i32
    %c0_i32_0 = arith.constant 0 : i32
    return %arg0, %c0_i32 : i32, i32
  }
}

</mosaic_0001>

<llo_original>
// kernel: head_forward.1
$region0: #{head_forward.1}
  #allocation0 [shape = 'u32[]', space=smem, size = 0x4, offset = 0x4, fixed_abs, tag = 'smem constant byte address 0x4 - core index']
  #allocation1 [shape = 'u32[72,128]{1,0:T(1,128)}', space=vmem, size = 0x9000, scoped, tag = 'internal scratch']
  %s0 = inlined_call_operand.vmem [shape: f32[2,20], index: 0, kind: input, shape index: {}]
  %s1 = inlined_call_operand.hbm [shape: f32[20,384], index: 1, kind: input, shape index: {}]
  %s2 = inlined_call_operand.vmem [shape: f32[2,20], index: 2, kind: output, shape index: {}]
  %s3 = sld [smem:[#allocation0]]
  $region22: #{head_forward.1} parent=0
    _
  %s5 = ssub.s32 1, %s3
  %s6 = scalar_select 0, %s5, %s3
  $region1: #{head_forward.1} parent=0
    #allocation2 [shape = 'u8[36864]{0}', space=vmem, size = 0x9000, scoped, tag = 'input window, operand 1, single buffered']
    #allocation3 [shape = 's32[1]{0}', space=sflag, size = 0x4, scoped, tag = 'scoped memory for head_forward.1']
    %7 = vsyncpa [#allocation3], 0
    // Predicated region
    $region2: #{head_forward.1} parent=1 // pred_check
      _
    $region3: #{head_forward.1} parent=1 // pred_check_branch
      %9 = sbr.rel (0) target = $region5
    $region4: #{head_forward.1} parent=1 // pred_region
      _
    $region5: #{head_forward.1} parent=1 // pred_fallthru
      _
    // Predicated region
    $region6: #{head_forward.1} parent=1 // pred_check
      _
    $region7: #{head_forward.1} parent=1 // pred_check_branch
      %11 = sbr.rel (0) target = $region9
    $region8: #{head_forward.1} parent=1 // pred_region
      %13 = vsyncadd [#allocation3], 0
      %s14 = sshll.u32 %s1, 4
      %s15 = int_to_ptr.hbm [resolvable:$true] %s14
      %s16 = sshll.u32 [#allocation2], 4
      %s17 = int_to_ptr.vmem [resolvable:$true] %s16
      %22 = dma.hbm_to_vmem [thread:$0]  %s15, 1152, %s17, [#allocation3], 384, 384, 24
    $region9: #{head_forward.1} parent=1 // pred_fallthru
      _
    // Predicated region
    $region10: #{head_forward.1} parent=1 // pred_check
      _
    $region11: #{head_forward.1} parent=1 // pred_check_branch
      %24 = sbr.rel (0) target = $region13
    $region12: #{head_forward.1} parent=1 // pred_region
      %26 = dma.done [#allocation3], 1152
    $region13: #{head_forward.1} parent=1 // pred_fallthru
      _
    %v27 = vld [vmem:[%s0] sm:$0x3]
    %v28 = vld [vmem:[#allocation2] sm:$0xff]
    %v29 = vld [vmem:[#allocation2 + $0x8] sm:$0xff]
    %v30 = vld [vmem:[#allocation2 + $0x10] sm:$0xff]
    %v31 = vld [vmem:[#allocation2 + $0x18] sm:$0xff]
    %v32 = vld [vmem:[#allocation2 + $0x20] sm:$0xff]
    %v33 = vld [vmem:[#allocation2 + $0x28] sm:$0xff]
    %v34 = vld [vmem:[#allocation2 + $0x30] sm:$0xf]
    %v35 = vld [vmem:[#allocation2 + $0x38] sm:$0xf]
    %v36 = vld [vmem:[#allocation2 + $0x40] sm:$0xf]
    %vm37 = vcmask 162816
    %v39 = vsel %vm37, %v27, 0
    %vm41 = vcmask 1043456
    %v43 = vsel %vm41, %v34, 0
    %v46 = vsel %vm41, %v35, 0
    %v49 = vsel %vm41, %v36, 0
    %51 = vmatpush.msra.mxu0 0.0
    %52 = vmatpush.msra.mxu0 0.0
    %53 = vmatpush.msra.mxu0 0.0
    %54 = vmatpush.msra.mxu0 0.0
    %55 = vmatpush.msra.mxu0 0.0
    %56 = vmatpush.msra.mxu0 0.0
    %57 = vmatpush.msra.mxu0 0.0
    %58 = vmatpush.msra.mxu0 0.0
    %59 = vmatpush.msra.mxu0 0.0
    %60 = vmatpush.msra.mxu0 0.0
    %61 = vmatpush.msra.mxu0 0.0
    %62 = vmatpush.msra.mxu0 0.0
    %63 = vmatpush.msra.mxu0 0.0
    %64 = vmatpush.msra.mxu0 %v43
    %65 = vmatpush.msra.mxu0 %v31
    %66 = vmatpush.msra.mxu0 %v28
    %67 = vmatmul.f32.gmra.mxu0 %v39
    %v68 = vpop.f32.mrf.mxu0
    %v69 = vadd.f32 0.0, %v68
    %70 = vdwg.mxu0
    %71 = vmatpush.msra.mxu0 0.0
    %72 = vmatpush.msra.mxu0 0.0
    %73 = vmatpush.msra.mxu0 0.0
    %74 = vmatpush.msra.mxu0 0.0
    %75 = vmatpush.msra.mxu0 0.0
    %76 = vmatpush.msra.mxu0 0.0
    %77 = vmatpush.msra.mxu0 0.0
    %78 = vmatpush.msra.mxu0 0.0
    %79 = vmatpush.msra.mxu0 0.0
    %80 = vmatpush.msra.mxu0 0.0
    %81 = vmatpush.msra.mxu0 0.0
    %82 = vmatpush.msra.mxu0 0.0
    %83 = vmatpush.msra.mxu0 0.0
    %84 = vmatpush.msra.mxu0 %v46
    %85 = vmatpush.msra.mxu0 %v32
    %86 = vmatpush.msra.mxu0 %v29
    %87 = vmatmul.f32.gmra.mxu0 %v39
    %v88 = vpop.f32.mrf.mxu0
    %v89 = vadd.f32 0.0, %v88
    %90 = vdwg.mxu0
    %91 = vmatpush.msra.mxu0 0.0
    %92 = vmatpush.msra.mxu0 0.0
    %93 = vmatpush.msra.mxu0 0.0
    %94 = vmatpush.msra.mxu0 0.0
    %95 = vmatpush.msra.mxu0 0.0
    %96 = vmatpush.msra.mxu0 0.0
    %97 = vmatpush.msra.mxu0 0.0
    %98 = vmatpush.msra.mxu0 0.0
    %99 = vmatpush.msra.mxu0 0.0
    %100 = vmatpush.msra.mxu0 0.0
    %101 = vmatpush.msra.mxu0 0.0
    %102 = vmatpush.msra.mxu0 0.0
    %103 = vmatpush.msra.mxu0 0.0
    %104 = vmatpush.msra.mxu0 %v49
    %105 = vmatpush.msra.mxu0 %v33
    %106 = vmatpush.msra.mxu0 %v30
    %107 = vmatmul.f32.gmra.mxu0 %v39
    %v108 = vpop.f32.mrf.mxu0
    %v109 = vadd.f32 0.0, %v108
    %110 = vdwg.mxu0
    %v111 = vmul.f32 %v69, %v89
    %v112 = vmul.f32 %v69, %v109
    %v113 = vlaneseq
    %v114 = vshrl.u32 %v113, 7
    %v115 = vadd.s32 %v114, 8
    %v116 = vadd.s32 %v114, 16
    %v117 = vadd.s32 %v114, 24
    %v118 = vadd.s32 %v114, 32
    %v119 = vadd.s32 %v114, 40
    %v120 = vadd.s32 %v114, 48
    %v121 = vadd.s32 %v114, 56
    %v122 = vadd.s32 %v114, 64
    %v123 = vadd.s32 %v114, 72
    %v124 = vadd.s32 %v114, 80
    %v125 = vadd.s32 %v114, 88
    %v126 = vadd.s32 %v114, 96
    %v127 = vadd.s32 %v114, 104
    %v128 = vadd.s32 %v114, 112
    %v129 = vadd.s32 %v114, 120
    %v130 = vadd.s32 %v114, 128
    %v131 = vadd.s32 %v114, 136
    %v132 = vadd.s32 %v114, 144
    %v133 = vadd.s32 %v114, 152
    %v134 = vadd.s32 %v114, 160
    %v135 = vadd.s32 %v114, 168
    %v136 = vadd.s32 %v114, 176
    %v137 = vadd.s32 %v114, 184
    %v138 = vadd.s32 %v114, 192
    %v139 = vadd.s32 %v114, 200
    %v140 = vadd.s32 %v114, 208
    %v141 = vadd.s32 %v114, 216
    %v142 = vadd.s32 %v114, 224
    %v143 = vadd.s32 %v114, 232
    %v144 = vadd.s32 %v114, 240
    %v145 = vadd.s32 %v114, 248
    %v146 = vlaneseq
    %v147 = vand.u32 %v146, 127
    %vm148 = vcmp.ge.s32.totalorder %v147, 10
    %v149 = vsel %vm148, 1, 0
    %v150 = vmul.u32 %v149, 10
    %v151 = vsub.s32 %v147, %v150
    %v152 = vmul.u32 %v151, 10
    %v153 = vmul.u32 %v149, 128
    %v154 = vadd.s32 %v152, %v153
    %vm155 = vcmp.ge.s32.totalorder %v114, %v154
    %vm156 = vcmp.ge.s32.totalorder %v115, %v154
    %vm157 = vcmp.ge.s32.totalorder %v116, %v154
    %vm158 = vcmp.ge.s32.totalorder %v117, %v154
    %vm159 = vcmp.ge.s32.totalorder %v118, %v154
    %vm160 = vcmp.ge.s32.totalorder %v119, %v154
    %vm161 = vcmp.ge.s32.totalorder %v120, %v154
    %vm162 = vcmp.ge.s32.totalorder %v121, %v154
    %vm163 = vcmp.ge.s32.totalorder %v122, %v154
    %vm164 = vcmp.ge.s32.totalorder %v123, %v154
    %vm165 = vcmp.ge.s32.totalorder %v124, %v154
    %vm166 = vcmp.ge.s32.totalorder %v125, %v154
    %vm167 = vcmp.ge.s32.totalorder %v126, %v154
    %vm168 = vcmp.ge.s32.totalorder %v127, %v154
    %vm169 = vcmp.ge.s32.totalorder %v128, %v154
    %vm170 = vcmp.ge.s32.totalorder %v129, %v154
    %vm171 = vcmp.ge.s32.totalorder %v130, %v154
    %vm172 = vcmp.ge.s32.totalorder %v131, %v154
    %vm173 = vcmp.ge.s32.totalorder %v132, %v154
    %vm174 = vcmp.ge.s32.totalorder %v133, %v154
    %vm175 = vcmp.ge.s32.totalorder %v134, %v154
    %vm176 = vcmp.ge.s32.totalorder %v135, %v154
    %vm177 = vcmp.ge.s32.totalorder %v136, %v154
    %vm178 = vcmp.ge.s32.totalorder %v137, %v154
    %vm179 = vcmp.ge.s32.totalorder %v138, %v154
    %vm180 = vcmp.ge.s32.totalorder %v139, %v154
    %vm181 = vcmp.ge.s32.totalorder %v140, %v154
    %vm182 = vcmp.ge.s32.totalorder %v141, %v154
    %vm183 = vcmp.ge.s32.totalorder %v142, %v154
    %vm184 = vcmp.ge.s32.totalorder %v143, %v154
    %vm185 = vcmp.ge.s32.totalorder %v144, %v154
    %vm186 = vcmp.ge.s32.totalorder %v145, %v154
    %v187 = vadd.s32 %v154, 10
    %vm188 = vcmp.lt.s32.totalorder %v114, %v187
    %vm189 = vcmp.lt.s32.totalorder %v115, %v187
    %vm190 = vcmp.lt.s32.totalorder %v116, %v187
    %vm191 = vcmp.lt.s32.totalorder %v117, %v187
    %vm192 = vcmp.lt.s32.totalorder %v118, %v187
    %vm193 = vcmp.lt.s32.totalorder %v119, %v187
    %vm194 = vcmp.lt.s32.totalorder %v120, %v187
    %vm195 = vcmp.lt.s32.totalorder %v121, %v187
    %vm196 = vcmp.lt.s32.totalorder %v122, %v187
    %vm197 = vcmp.lt.s32.totalorder %v123, %v187
    %vm198 = vcmp.lt.s32.totalorder %v124, %v187
    %vm199 = vcmp.lt.s32.totalorder %v125, %v187
    %vm200 = vcmp.lt.s32.totalorder %v126, %v187
    %vm201 = vcmp.lt.s32.totalorder %v127, %v187
    %vm202 = vcmp.lt.s32.totalorder %v128, %v187
    %vm203 = vcmp.lt.s32.totalorder %v129, %v187
    %vm204 = vcmp.lt.s32.totalorder %v130, %v187
    %vm205 = vcmp.lt.s32.totalorder %v131, %v187
    %vm206 = vcmp.lt.s32.totalorder %v132, %v187
    %vm207 = vcmp.lt.s32.totalorder %v133, %v187
    %vm208 = vcmp.lt.s32.totalorder %v134, %v187
    %vm209 = vcmp.lt.s32.totalorder %v135, %v187
    %vm210 = vcmp.lt.s32.totalorder %v136, %v187
    %vm211 = vcmp.lt.s32.totalorder %v137, %v187
    %vm212 = vcmp.lt.s32.totalorder %v138, %v187
    %vm213 = vcmp.lt.s32.totalorder %v139, %v187
    %vm214 = vcmp.lt.s32.totalorder %v140, %v187
    %vm215 = vcmp.lt.s32.totalorder %v141, %v187
    %vm216 = vcmp.lt.s32.totalorder %v142, %v187
    %vm217 = vcmp.lt.s32.totalorder %v143, %v187
    %vm218 = vcmp.lt.s32.totalorder %v144, %v187
    %vm219 = vcmp.lt.s32.totalorder %v145, %v187
    %vm220 = vmand %vm155, %vm188
    %vm221 = vmand %vm156, %vm189
    %vm222 = vmand %vm157, %vm190
    %vm223 = vmand %vm158, %vm191
    %vm224 = vmand %vm159, %vm192
    %vm225 = vmand %vm160, %vm193
    %vm226 = vmand %vm161, %vm194
    %vm227 = vmand %vm162, %vm195
    %vm228 = vmand %vm163, %vm196
    %vm229 = vmand %vm164, %vm197
    %vm230 = vmand %vm165, %vm198
    %vm231 = vmand %vm166, %vm199
    %vm232 = vmand %vm167, %vm200
    %vm233 = vmand %vm168, %vm201
    %vm234 = vmand %vm169, %vm202
    %vm235 = vmand %vm170, %vm203
    %vm236 = vmand %vm171, %vm204
    %vm237 = vmand %vm172, %vm205
    %vm238 = vmand %vm173, %vm206
    %vm239 = vmand %vm174, %vm207
    %vm240 = vmand %vm175, %vm208
    %vm241 = vmand %vm176, %vm209
    %vm242 = vmand %vm177, %vm210
    %vm243 = vmand %vm178, %vm211
    %vm244 = vmand %vm179, %vm212
    %vm245 = vmand %vm180, %vm213
    %vm246 = vmand %vm181, %vm214
    %vm247 = vmand %vm182, %vm215
    %vm248 = vmand %vm183, %vm216
    %vm249 = vmand %vm184, %vm217
    %vm250 = vmand %vm185, %vm218
    %vm251 = vmand %vm186, %vm219
    %v252 = vsel %vm220, 1, 0
    %v253 = vsel %vm221, 1, 0
    %v254 = vsel %vm222, 1, 0
    %v255 = vsel %vm223, 1, 0
    %v256 = vsel %vm224, 1, 0
    %v257 = vsel %vm225, 1, 0
    %v258 = vsel %vm226, 1, 0
    %v259 = vsel %vm227, 1, 0
    %v260 = vsel %vm228, 1, 0
    %v261 = vsel %vm229, 1, 0
    %v262 = vsel %vm230, 1, 0
    %v263 = vsel %vm231, 1, 0
    %v264 = vsel %vm232, 1, 0
    %v265 = vsel %vm233, 1, 0
    %v266 = vsel %vm234, 1, 0
    %v267 = vsel %vm235, 1, 0
    %v268 = vsel %vm236, 1, 0
    %v269 = vsel %vm237, 1, 0
    %v270 = vsel %vm238, 1, 0
    %v271 = vsel %vm239, 1, 0
    %v272 = vsel %vm240, 1, 0
    %v273 = vsel %vm241, 1, 0
    %v274 = vsel %vm242, 1, 0
    %v275 = vsel %vm243, 1, 0
    %v276 = vsel %vm244, 1, 0
    %v277 = vsel %vm245, 1, 0
    %v278 = vsel %vm246, 1, 0
    %v279 = vsel %vm247, 1, 0
    %v280 = vsel %vm248, 1, 0
    %v281 = vsel %vm249, 1, 0
    %v282 = vsel %vm250, 1, 0
    %v283 = vsel %vm251, 1, 0
    %v284 = vcvt.s32.f32 %v252
    %v285 = vcvt.s32.f32 %v253
    %v286 = vcvt.s32.f32 %v254
    %v287 = vcvt.s32.f32 %v255
    %v288 = vcvt.s32.f32 %v256
    %v289 = vcvt.s32.f32 %v257
    %v290 = vcvt.s32.f32 %v258
    %v291 = vcvt.s32.f32 %v259
    %v292 = vcvt.s32.f32 %v260
    %v293 = vcvt.s32.f32 %v261
    %v294 = vcvt.s32.f32 %v262
    %v295 = vcvt.s32.f32 %v263
    %v296 = vcvt.s32.f32 %v264
    %v297 = vcvt.s32.f32 %v265
    %v298 = vcvt.s32.f32 %v266
    %v299 = vcvt.s32.f32 %v267
    %v300 = vcvt.s32.f32 %v268
    %v301 = vcvt.s32.f32 %v269
    %v302 = vcvt.s32.f32 %v270
    %v303 = vcvt.s32.f32 %v271
    %v304 = vcvt.s32.f32 %v272
    %v305 = vcvt.s32.f32 %v273
    %v306 = vcvt.s32.f32 %v274
    %v307 = vcvt.s32.f32 %v275
    %v308 = vcvt.s32.f32 %v276
    %v309 = vcvt.s32.f32 %v277
    %v310 = vcvt.s32.f32 %v278
    %v311 = vcvt.s32.f32 %v279
    %v312 = vcvt.s32.f32 %v280
    %v313 = vcvt.s32.f32 %v281
    %v314 = vcvt.s32.f32 %v282
    %v315 = vcvt.s32.f32 %v283
    %316 = vmatpush.msra.mxu0 %v299
    %317 = vmatpush.msra.mxu0 %v298
    %318 = vmatpush.msra.mxu0 %v297
    %319 = vmatpush.msra.mxu0 %v296
    %320 = vmatpush.msra.mxu0 %v295
    %321 = vmatpush.msra.mxu0 %v294
    %322 = vmatpush.msra.mxu0 %v293
    %323 = vmatpush.msra.mxu0 %v292
    %324 = vmatpush.msra.mxu0 %v291
    %325 = vmatpush.msra.mxu0 %v290
    %326 = vmatpush.msra.mxu0 %v289
    %327 = vmatpush.msra.mxu0 %v288
    %328 = vmatpush.msra.mxu0 %v287
    %329 = vmatpush.msra.mxu0 %v286
    %330 = vmatpush.msra.mxu0 %v285
    %331 = vmatpush.msra.mxu0 %v284
    %332 = vmatmul.f32.gmra.mxu0 %v111
    %v333 = vpop.f32.mrf.mxu0
    %v334 = vadd.f32 0.0, %v333
    %335 = vdwg.mxu0
    %336 = vmatpush.msra.mxu0 %v315
    %337 = vmatpush.msra.mxu0 %v314
    %338 = vmatpush.msra.mxu0 %v313
    %339 = vmatpush.msra.mxu0 %v312
    %340 = vmatpush.msra.mxu0 %v311
    %341 = vmatpush.msra.mxu0 %v310
    %342 = vmatpush.msra.mxu0 %v309
    %343 = vmatpush.msra.mxu0 %v308
    %344 = vmatpush.msra.mxu0 %v307
    %345 = vmatpush.msra.mxu0 %v306
    %346 = vmatpush.msra.mxu0 %v305
    %347 = vmatpush.msra.mxu0 %v304
    %348 = vmatpush.msra.mxu0 %v303
    %349 = vmatpush.msra.mxu0 %v302
    %350 = vmatpush.msra.mxu0 %v301
    %351 = vmatpush.msra.mxu0 %v300
    %352 = vmatmul.f32.gmra.mxu0 %v112
    %v353 = vpop.f32.mrf.mxu0
    %v354 = vadd.f32 %v334, %v353
    %355 = vdwg.mxu0
    %357 = vrot.lane.b32.xlu0 %v354, 118
    %v358 = vpop.permute.xlu0 %357
    %v360 = vsub.f32 %v354, %v358
    %v361 = vmul.f32 %v360, 1.442695
    %v362 = vpow.pop %v361
    %v363 = vadd.f32 %v362, 1.0
    %v364 = vrcp.pop %v363
    %v365 = vmul.f32 %v363, %v364
    %v366 = vsub.f32 1.0, %v365
    %v367 = vmul.f32 %v364, %v366
    %v368 = vadd.f32 %v364, %v367
    %vm369 = vweird.f32 %v363
    %vm370 = vweird.f32 %v364
    %vm371 = vmor %vm369, %vm370
    %v372 = vsel %vm371, %v364, %v368
    %v373 = vand.u32 2147483647, %v363
    %vm374 = vcmp.eq.f32.partialorder %v373, 8.507059e+37
    %v375 = vand.u32 %v363, 2147483648
    %v376 = vor.u32 1.1754944e-38, %v375
    %v377 = vsel %vm374, %v376, %v372
    %v378 = vmul.f32 1.0, %v377
    %380 = vrot.lane.b32.xlu0 %v109, 10
    %v381 = vpop.permute.xlu0 %380
    %v383 = vsub.f32 %v109, %v381
    %385 = vrot.lane.b32.xlu0 %v383, 18
    %v386 = vpop.permute.xlu0 %385
    %v388 = vmul.f32 %v378, %v386
    %390 = vrot.lane.b32.xlu0 %v388, 100
    %v391 = vpop.permute.xlu0 %390
    %v393 = vadd.f32 %v109, %v391
    %394 = vrot.lane.b32.xlu0 %v109, 28
    %v395 = vpop.permute.xlu0 %394
    %398 = vrot.lane.b32.xlu0 %v393, 38
    %v399 = vpop.permute.xlu0 %398
    %vm401 = vcmask 80896
    %v402 = vsel %vm401, %v395, %v399
    %vm403 = vcmask 156672
    %404 = vst.msk [vmem:[%s2] sm:$0x3] %vm403, %v402
    // Predicated region
    $region14: #{head_forward.1} parent=1 // pred_check
      _
    $region15: #{head_forward.1} parent=1 // pred_check_branch
      %406 = sbr.rel (0) target = $region17
    $region16: #{head_forward.1} parent=1 // pred_region
      _
    $region17: #{head_forward.1} parent=1 // pred_fallthru
      _
    // Predicated region
    $region18: #{head_forward.1} parent=1 // pred_check
      _
    $region19: #{head_forward.1} parent=1 // pred_check_branch
      %408 = sbr.rel (0) target = $region21
    $region20: #{head_forward.1} parent=1 // pred_region
      _
    $region21: #{head_forward.1} parent=1 // pred_fallthru
      _
    %409 = vsyncpa [#allocation3], 1

</llo_original>
